<compile_context>
chip_gen: v5e
topology: v5e:2x2
jax: 0.10.0
libtpu: 0.0.40
codegen_flags: <defaults>
</compile_context>

<pallas_src>
import jax
import jax.numpy as jnp
from jax.experimental import pallas as pl
from jax.experimental.pallas import tpu as pltpu


def _fflayer_kernel(x_ref, gamma_ref, beta_ref, w_ref, b_ref, o_ref):
    # ---- LayerNorm over the last dim, f32 (eps = 1e-5, PyTorch default) ----
    x = x_ref[...].astype(jnp.float32)
    mean = jnp.mean(x, axis=-1, keepdims=True)
    var = jnp.mean(jnp.square(x - mean), axis=-1, keepdims=True)
    xn = (x - mean) * jax.lax.rsqrt(var + 1e-5)
    xn = xn * gamma_ref[...] + beta_ref[...]

    # ---- Linear(in_dim -> out_dim_padded): bf16 operands, f32 accumulation ----
    h = jnp.dot(xn.astype(jnp.bfloat16), w_ref[...],
                preferred_element_type=jnp.float32) + b_ref[...]

    # ---- GELU (exact erf form, matches nn.GELU default), f32 ----
    y = 0.5 * h * (1.0 + jax.lax.erf(h * jnp.float32(0.7071067811865476)))

    # TODO(synk): nn.Dropout(p=0.1) is identity in eval/inference; training-mode
    # random masking (pltpu.prng_*) intentionally not applied here.
    o_ref[...] = y.astype(o_ref.dtype)


def _round_up(n, m):
    return ((n + m - 1) // m) * m


def _build_call(m_pad, in_dim, out_pad, tile_rows, out_dtype, *, single_buffer):
    """Construct the pallas_call for the padded (m_pad, in_dim)->(m_pad, out_pad) slab."""

    def const_spec(shape):
        # Operands whose block never changes across the grid.
        if single_buffer:
            return pl.BlockSpec(shape, lambda i: (0, 0),
                                pipeline_mode=pl.Buffered(1))
        return pl.BlockSpec(shape, lambda i: (0, 0))

    grid = (m_pad // tile_rows,)
    flops = 2 * m_pad * in_dim * out_pad + 10 * m_pad * in_dim
    bytes_accessed = (m_pad * in_dim * 4            # x (f32)
                      + in_dim * out_pad * 2        # W (bf16)
                      + (2 * in_dim + out_pad) * 4  # gamma, beta, b (f32)
                      + m_pad * out_pad * 4)        # output
    cost = pl.CostEstimate(flops=flops,
                           transcendentals=m_pad * out_pad,
                           bytes_accessed=bytes_accessed)

    return pl.pallas_call(
        _fflayer_kernel,
        out_shape=jax.ShapeDtypeStruct((m_pad, out_pad), out_dtype),
        grid_spec=pltpu.PrefetchScalarGridSpec(
            num_scalar_prefetch=0,
            grid=grid,
            in_specs=[
                pl.BlockSpec((tile_rows, in_dim), lambda i: (i, 0)),  # x tile
                const_spec((1, in_dim)),        # gamma
                const_spec((1, in_dim)),        # beta
                const_spec((in_dim, out_pad)),  # W (in, out_pad), bf16
                const_spec((1, out_pad)),       # b
            ],
            out_specs=pl.BlockSpec((tile_rows, out_pad), lambda i: (i, 0)),
        ),
        compiler_params=pltpu.CompilerParams(
            dimension_semantics=("parallel",),
            vmem_limit_bytes=56 * 1024 * 1024,
        ),
        cost_estimate=cost,
    )


def ff_layer(x, params, *, tile_rows=256):
    """FFLayer forward: LayerNorm -> Linear -> GELU (Dropout = identity, eval)."""
    gamma, beta, w, b = params
    in_dim = x.shape[-1]
    out_dim = w.shape[-1]
    lead = x.shape[:-1]

    x2 = x.reshape(-1, in_dim)
    m = x2.shape[0]

    # Row tiling: big tiles, clamped for tiny inputs, remainder handled by padding.
    tr = max(8, min(_round_up(tile_rows, 8), _round_up(m, 8)))
    m_pad = _round_up(m, tr)
    if m_pad != m:
        x2 = jnp.pad(x2, ((0, m_pad - m), (0, 0)))

    # Lane-dense output: pad out_dim to a multiple of 128 with zero columns
    # (zero weight/bias columns produce gelu(0)=0, sliced away afterwards).
    out_pad = _round_up(out_dim, 128)
    w_p = w.astype(jnp.bfloat16)
    b_p = b.astype(jnp.float32)
    if out_pad != out_dim:
        w_p = jnp.pad(w_p, ((0, 0), (0, out_pad - out_dim)))
        b_p = jnp.pad(b_p, ((0, out_pad - out_dim),))

    gamma2 = gamma.reshape(1, in_dim).astype(jnp.float32)
    beta2 = beta.reshape(1, in_dim).astype(jnp.float32)
    b2 = b_p.reshape(1, out_pad)

    args = (x2, gamma2, beta2, w_p, b2)
    try:
        out2 = _build_call(m_pad, in_dim, out_pad, tr, x.dtype,
                           single_buffer=True)(*args)
        out2 = jax.block_until_ready(out2)
    except Exception:
        # Fallback if this JAX build rejects pl.Buffered(1) on pallas_call specs.
        out2 = _build_call(m_pad, in_dim, out_pad, tr, x.dtype,
                           single_buffer=False)(*args)

    return out2[:m, :out_dim].reshape(*lead, out_dim)


def init_params(key, in_dim, out_dim):
    """Deterministic synthetic parameters (shapes match nn.LayerNorm/nn.Linear)."""
    k1, k2, k3, k4 = jax.random.split(key, 4)
    # Randomized affine (instead of the 1/0 PyTorch init) to exercise the kernel.
    gamma = 1.0 + 0.1 * jax.random.normal(k3, (in_dim,), jnp.float32)
    beta = 0.1 * jax.random.normal(k4, (in_dim,), jnp.float32)
    # nn.Linear stores (out, in); pre-transposed to (in, out) for x @ W.
    lim = 1.0 / jnp.sqrt(in_dim)
    w = jax.random.uniform(k1, (in_dim, out_dim), jnp.float32, -lim, lim)
    b = jax.random.uniform(k2, (out_dim,), jnp.float32, -lim, lim)
    return gamma, beta, w, b


def _reference(x, params):
    gamma, beta, w, b = params
    xf = x.astype(jnp.float32)
    mean = jnp.mean(xf, axis=-1, keepdims=True)
    var = jnp.mean(jnp.square(xf - mean), axis=-1, keepdims=True)
    xn = (xf - mean) * jax.lax.rsqrt(var + 1e-5) * gamma + beta
    h = xn @ w + b
    h = 0.5 * h * (1.0 + jax.lax.erf(h / jnp.sqrt(2.0)))
    return h.astype(x.dtype)  # Dropout is identity in eval mode


if __name__ == "__main__":
    batch, seq, in_dim, out_dim = 2, 8, 32, 16

    key = jax.random.PRNGKey(0)
    kx, kp = jax.random.split(key)
    x = jax.random.normal(kx, (batch, seq, in_dim), jnp.float32)
    params = init_params(kp, in_dim, out_dim)

    y = ff_layer(x, params)
    y = jax.block_until_ready(y)

    y_ref = _reference(x, params)
    assert y.shape == (batch, seq, out_dim)
    # bf16 matmul operands -> ~1e-2-level deviation vs the pure-f32 reference.
    assert jnp.allclose(y, y_ref, atol=3e-2, rtol=3e-2), float(
        jnp.max(jnp.abs(y - y_ref)))

    print("KERNEL_OK")
</pallas_src>

<mosaic_0001>
module attributes {stable_mosaic.version = 11 : i64} {
  func.func @_fflayer_kernel(%arg0: i32, %arg1: memref<16x32xf32, #tpu.memory_space<vmem>>, %arg2: memref<1x32xf32, #tpu.memory_space<vmem>>, %arg3: memref<1x32xf32, #tpu.memory_space<vmem>>, %arg4: memref<32x128xbf16, #tpu.memory_space<vmem>>, %arg5: memref<1x128xf32, #tpu.memory_space<vmem>>, %arg6: memref<16x128xf32, #tpu.memory_space<vmem>>) attributes {dimension_semantics = [#tpu.dimension_semantics<parallel>], iteration_bounds = array<i64: 1>, scalar_prefetch = 0 : i64, scratch_operands = 0 : i64, tpu.core_type = #tpu.core_type<tc>, window_params = [{transform_indices = @transform_0, window_bounds = array<i64: 16, 32>}, {pipeline_mode = #tpu.pipeline_mode<synchronous>, transform_indices = @transform_1, window_bounds = array<i64: 1, 32>}, {pipeline_mode = #tpu.pipeline_mode<synchronous>, transform_indices = @transform_2, window_bounds = array<i64: 1, 32>}, {pipeline_mode = #tpu.pipeline_mode<synchronous>, transform_indices = @transform_3, window_bounds = array<i64: 32, 128>}, {pipeline_mode = #tpu.pipeline_mode<synchronous>, transform_indices = @transform_4, window_bounds = array<i64: 1, 128>}, {transform_indices = @transform_5, window_bounds = array<i64: 16, 128>}]} {
    %c0 = arith.constant 0 : index
    %c0_0 = arith.constant 0 : index
    %0 = vector.load %arg1[%c0, %c0_0] : memref<16x32xf32, #tpu.memory_space<vmem>>, vector<16x32xf32>
    %cst = arith.constant dense<0.000000e+00> : vector<16xf32>
    %1 = vector.multi_reduction <add>, %0, %cst [1] : vector<16x32xf32> to vector<16xf32>
    %2 = vector.shape_cast %1 : vector<16xf32> to vector<16x1xf32>
    %cst_1 = arith.constant 3.200000e+01 : f32
    %3 = vector.broadcast %cst_1 : f32 to vector<16x1xf32>
    %4 = arith.divf %2, %3 : vector<16x1xf32>
    %5 = vector.broadcast %4 : vector<16x1xf32> to vector<16x32xf32>
    %6 = arith.subf %0, %5 : vector<16x32xf32>
    %7 = arith.mulf %6, %6 : vector<16x32xf32>
    %cst_2 = arith.constant dense<0.000000e+00> : vector<16xf32>
    %8 = vector.multi_reduction <add>, %7, %cst_2 [1] : vector<16x32xf32> to vector<16xf32>
    %9 = vector.shape_cast %8 : vector<16xf32> to vector<16x1xf32>
    %cst_3 = arith.constant 3.200000e+01 : f32
    %10 = vector.broadcast %cst_3 : f32 to vector<16x1xf32>
    %11 = arith.divf %9, %10 : vector<16x1xf32>
    %12 = vector.broadcast %4 : vector<16x1xf32> to vector<16x32xf32>
    %13 = arith.subf %0, %12 : vector<16x32xf32>
    %cst_4 = arith.constant 9.99999974E-6 : f32
    %14 = vector.broadcast %cst_4 : f32 to vector<16x1xf32>
    %15 = arith.addf %11, %14 : vector<16x1xf32>
    %16 = math.rsqrt %15 : vector<16x1xf32>
    %17 = vector.broadcast %16 : vector<16x1xf32> to vector<16x32xf32>
    %18 = arith.mulf %13, %17 : vector<16x32xf32>
    %c0_5 = arith.constant 0 : index
    %c0_6 = arith.constant 0 : index
    %19 = vector.load %arg2[%c0_5, %c0_6] : memref<1x32xf32, #tpu.memory_space<vmem>>, vector<1x32xf32>
    %20 = vector.broadcast %19 : vector<1x32xf32> to vector<16x32xf32>
    %21 = arith.mulf %18, %20 : vector<16x32xf32>
    %c0_7 = arith.constant 0 : index
    %c0_8 = arith.constant 0 : index
    %22 = vector.load %arg3[%c0_7, %c0_8] : memref<1x32xf32, #tpu.memory_space<vmem>>, vector<1x32xf32>
    %23 = vector.broadcast %22 : vector<1x32xf32> to vector<16x32xf32>
    %24 = arith.addf %21, %23 : vector<16x32xf32>
    %25 = arith.truncf %24 : vector<16x32xf32> to vector<16x32xbf16>
    %c0_9 = arith.constant 0 : index
    %c0_10 = arith.constant 0 : index
    %26 = vector.load %arg4[%c0_9, %c0_10] : memref<32x128xbf16, #tpu.memory_space<vmem>>, vector<32x128xbf16>
    %cst_11 = arith.constant dense<0.000000e+00> : vector<16x128xf32>
    %27 = tpu.matmul %25, %26, %cst_11 {dimension_numbers = #tpu.dot_dimension_numbers<[1], [0], [0], [1], [0, 0, 1, 1], [], []>} : vector<16x32xbf16>, vector<32x128xbf16>, vector<16x128xf32> -> vector<16x128xf32>
    %c0_12 = arith.constant 0 : index
    %c0_13 = arith.constant 0 : index
    %28 = vector.load %arg5[%c0_12, %c0_13] : memref<1x128xf32, #tpu.memory_space<vmem>>, vector<1x128xf32>
    %29 = vector.broadcast %28 : vector<1x128xf32> to vector<16x128xf32>
    %30 = arith.addf %27, %29 : vector<16x128xf32>
    %cst_14 = arith.constant 5.000000e-01 : f32
    %31 = vector.broadcast %cst_14 : f32 to vector<16x128xf32>
    %32 = arith.mulf %31, %30 : vector<16x128xf32>
    %cst_15 = arith.constant 0.707106769 : f32
    %33 = vector.broadcast %cst_15 : f32 to vector<16x128xf32>
    %34 = arith.mulf %30, %33 : vector<16x128xf32>
    %35 = math.erf %34 : vector<16x128xf32>
    %cst_16 = arith.constant 1.000000e+00 : f32
    %36 = vector.broadcast %cst_16 : f32 to vector<16x128xf32>
    %37 = arith.addf %36, %35 : vector<16x128xf32>
    %38 = arith.mulf %32, %37 : vector<16x128xf32>
    %c0_17 = arith.constant 0 : index
    %c0_18 = arith.constant 0 : index
    %39 = vector.load %arg6[%c0_17, %c0_18] : memref<16x128xf32, #tpu.memory_space<vmem>>, vector<16x128xf32>
    tpu.vector_store %arg6[%c0_17, %c0_18], %38 {strides = array<i32>} : memref<16x128xf32, #tpu.memory_space<vmem>>, vector<16x128xf32>,
    return
  }
  func.func @transform_0(%arg0: i32) -> (i32, i32) {
    %c0_i32 = arith.constant 0 : i32
    %c0_i32_0 = arith.constant 0 : i32
    return %arg0, %c0_i32 : i32, i32
  }
  func.func @transform_1(%arg0: i32) -> (i32, i32) {
    %c0_i32 = arith.constant 0 : i32
    %c0_i32_0 = arith.constant 0 : i32
    %c0_i32_1 = arith.constant 0 : i32
    return %c0_i32, %c0_i32_0 : i32, i32
  }
  func.func @transform_2(%arg0: i32) -> (i32, i32) {
    %c0_i32 = arith.constant 0 : i32
    %c0_i32_0 = arith.constant 0 : i32
    %c0_i32_1 = arith.constant 0 : i32
    return %c0_i32, %c0_i32_0 : i32, i32
  }
  func.func @transform_3(%arg0: i32) -> (i32, i32) {
    %c0_i32 = arith.constant 0 : i32
    %c0_i32_0 = arith.constant 0 : i32
    %c0_i32_1 = arith.constant 0 : i32
    return %c0_i32, %c0_i32_0 : i32, i32
  }
  func.func @transform_4(%arg0: i32) -> (i32, i32) {
    %c0_i32 = arith.constant 0 : i32
    %c0_i32_0 = arith.constant 0 : i32
    %c0_i32_1 = arith.constant 0 : i32
    return %c0_i32, %c0_i32_0 : i32, i32
  }
  func.func @transform_5(%arg0: i32) -> (i32, i32) {
    %c0_i32 = arith.constant 0 : i32
    %c0_i32_0 = arith.constant 0 : i32
    return %arg0, %c0_i32 : i32, i32
  }
}

module attributes {stable_mosaic.version = 11 : i64} {
  func.func @_fflayer_kernel(%arg0: i32, %arg1: memref<16x32xf32, #tpu.memory_space<vmem>>, %arg2: memref<1x32xf32, #tpu.memory_space<vmem>>, %arg3: memref<1x32xf32, #tpu.memory_space<vmem>>, %arg4: memref<32x128xbf16, #tpu.memory_space<vmem>>, %arg5: memref<1x128xf32, #tpu.memory_space<vmem>>, %arg6: memref<16x128xf32, #tpu.memory_space<vmem>>) attributes {dimension_semantics = [#tpu.dimension_semantics<parallel>], iteration_bounds = array<i64: 1>, scalar_prefetch = 0 : i64, scratch_operands = 0 : i64, tpu.core_type = #tpu.core_type<tc>, window_params = [{transform_indices = @transform_0, window_bounds = array<i64: 16, 32>}, {pipeline_mode = #tpu.pipeline_mode<synchronous>, transform_indices = @transform_1, window_bounds = array<i64: 1, 32>}, {pipeline_mode = #tpu.pipeline_mode<synchronous>, transform_indices = @transform_2, window_bounds = array<i64: 1, 32>}, {pipeline_mode = #tpu.pipeline_mode<synchronous>, transform_indices = @transform_3, window_bounds = array<i64: 32, 128>}, {pipeline_mode = #tpu.pipeline_mode<synchronous>, transform_indices = @transform_4, window_bounds = array<i64: 1, 128>}, {transform_indices = @transform_5, window_bounds = array<i64: 16, 128>}]} {
    %c0 = arith.constant 0 : index
    %c0_0 = arith.constant 0 : index
    %0 = vector.load %arg1[%c0, %c0_0] : memref<16x32xf32, #tpu.memory_space<vmem>>, vector<16x32xf32>
    %cst = arith.constant dense<0.000000e+00> : vector<16xf32>
    %1 = vector.multi_reduction <add>, %0, %cst [1] : vector<16x32xf32> to vector<16xf32>
    %2 = vector.shape_cast %1 : vector<16xf32> to vector<16x1xf32>
    %cst_1 = arith.constant 3.200000e+01 : f32
    %3 = vector.broadcast %cst_1 : f32 to vector<16x1xf32>
    %4 = arith.divf %2, %3 : vector<16x1xf32>
    %5 = vector.broadcast %4 : vector<16x1xf32> to vector<16x32xf32>
    %6 = arith.subf %0, %5 : vector<16x32xf32>
    %7 = arith.mulf %6, %6 : vector<16x32xf32>
    %cst_2 = arith.constant dense<0.000000e+00> : vector<16xf32>
    %8 = vector.multi_reduction <add>, %7, %cst_2 [1] : vector<16x32xf32> to vector<16xf32>
    %9 = vector.shape_cast %8 : vector<16xf32> to vector<16x1xf32>
    %cst_3 = arith.constant 3.200000e+01 : f32
    %10 = vector.broadcast %cst_3 : f32 to vector<16x1xf32>
    %11 = arith.divf %9, %10 : vector<16x1xf32>
    %12 = vector.broadcast %4 : vector<16x1xf32> to vector<16x32xf32>
    %13 = arith.subf %0, %12 : vector<16x32xf32>
    %cst_4 = arith.constant 9.99999974E-6 : f32
    %14 = vector.broadcast %cst_4 : f32 to vector<16x1xf32>
    %15 = arith.addf %11, %14 : vector<16x1xf32>
    %16 = math.rsqrt %15 : vector<16x1xf32>
    %17 = vector.broadcast %16 : vector<16x1xf32> to vector<16x32xf32>
    %18 = arith.mulf %13, %17 : vector<16x32xf32>
    %c0_5 = arith.constant 0 : index
    %c0_6 = arith.constant 0 : index
    %19 = vector.load %arg2[%c0_5, %c0_6] : memref<1x32xf32, #tpu.memory_space<vmem>>, vector<1x32xf32>
    %20 = vector.broadcast %19 : vector<1x32xf32> to vector<16x32xf32>
    %21 = arith.mulf %18, %20 : vector<16x32xf32>
    %c0_7 = arith.constant 0 : index
    %c0_8 = arith.constant 0 : index
    %22 = vector.load %arg3[%c0_7, %c0_8] : memref<1x32xf32, #tpu.memory_space<vmem>>, vector<1x32xf32>
    %23 = vector.broadcast %22 : vector<1x32xf32> to vector<16x32xf32>
    %24 = arith.addf %21, %23 : vector<16x32xf32>
    %25 = arith.truncf %24 : vector<16x32xf32> to vector<16x32xbf16>
    %c0_9 = arith.constant 0 : index
    %c0_10 = arith.constant 0 : index
    %26 = vector.load %arg4[%c0_9, %c0_10] : memref<32x128xbf16, #tpu.memory_space<vmem>>, vector<32x128xbf16>
    %cst_11 = arith.constant dense<0.000000e+00> : vector<16x128xf32>
    %27 = tpu.matmul %25, %26, %cst_11 {dimension_numbers = #tpu.dot_dimension_numbers<[1], [0], [0], [1], [0, 0, 1, 1], [], []>} : vector<16x32xbf16>, vector<32x128xbf16>, vector<16x128xf32> -> vector<16x128xf32>
    %c0_12 = arith.constant 0 : index
    %c0_13 = arith.constant 0 : index
    %28 = vector.load %arg5[%c0_12, %c0_13] : memref<1x128xf32, #tpu.memory_space<vmem>>, vector<1x128xf32>
    %29 = vector.broadcast %28 : vector<1x128xf32> to vector<16x128xf32>
    %30 = arith.addf %27, %29 : vector<16x128xf32>
    %cst_14 = arith.constant 5.000000e-01 : f32
    %31 = vector.broadcast %cst_14 : f32 to vector<16x128xf32>
    %32 = arith.mulf %31, %30 : vector<16x128xf32>
    %cst_15 = arith.constant 0.707106769 : f32
    %33 = vector.broadcast %cst_15 : f32 to vector<16x128xf32>
    %34 = arith.mulf %30, %33 : vector<16x128xf32>
    %35 = math.erf %34 : vector<16x128xf32>
    %cst_16 = arith.constant 1.000000e+00 : f32
    %36 = vector.broadcast %cst_16 : f32 to vector<16x128xf32>
    %37 = arith.addf %36, %35 : vector<16x128xf32>
    %38 = arith.mulf %32, %37 : vector<16x128xf32>
    %c0_17 = arith.constant 0 : index
    %c0_18 = arith.constant 0 : index
    %39 = vector.load %arg6[%c0_17, %c0_18] : memref<16x128xf32, #tpu.memory_space<vmem>>, vector<16x128xf32>
    tpu.vector_store %arg6[%c0_17, %c0_18], %38 {strides = array<i32>} : memref<16x128xf32, #tpu.memory_space<vmem>>, vector<16x128xf32>,
    return
  }
  func.func @transform_0(%arg0: i32) -> (i32, i32) {
    %c0_i32 = arith.constant 0 : i32
    %c0_i32_0 = arith.constant 0 : i32
    return %arg0, %c0_i32 : i32, i32
  }
  func.func @transform_1(%arg0: i32) -> (i32, i32) {
    %c0_i32 = arith.constant 0 : i32
    %c0_i32_0 = arith.constant 0 : i32
    %c0_i32_1 = arith.constant 0 : i32
    return %c0_i32, %c0_i32_0 : i32, i32
  }
  func.func @transform_2(%arg0: i32) -> (i32, i32) {
    %c0_i32 = arith.constant 0 : i32
    %c0_i32_0 = arith.constant 0 : i32
    %c0_i32_1 = arith.constant 0 : i32
    return %c0_i32, %c0_i32_0 : i32, i32
  }
  func.func @transform_3(%arg0: i32) -> (i32, i32) {
    %c0_i32 = arith.constant 0 : i32
    %c0_i32_0 = arith.constant 0 : i32
    %c0_i32_1 = arith.constant 0 : i32
    return %c0_i32, %c0_i32_0 : i32, i32
  }
  func.func @transform_4(%arg0: i32) -> (i32, i32) {
    %c0_i32 = arith.constant 0 : i32
    %c0_i32_0 = arith.constant 0 : i32
    %c0_i32_1 = arith.constant 0 : i32
    return %c0_i32, %c0_i32_0 : i32, i32
  }
  func.func @transform_5(%arg0: i32) -> (i32, i32) {
    %c0_i32 = arith.constant 0 : i32
    %c0_i32_0 = arith.constant 0 : i32
    return %arg0, %c0_i32 : i32, i32
  }
}

</mosaic_0001>

<llo_original>
// kernel: tpu_custom_call.1
$region0: #{tpu_custom_call.1}
  #allocation0 [shape = 'u32[]', space=smem, size = 0x4, offset = 0x4, fixed_abs, tag = 'smem constant byte address 0x4 - core index']
  #allocation1 [shape = 'u32[72,128]{1,0:T(1,128)}', space=vmem, size = 0x9000, scoped, tag = 'internal scratch']
  %s0 = inlined_call_operand.hbm [shape: f32[16,32], index: 0, kind: input, shape index: {}]
  %s1 = inlined_call_operand.hbm [shape: f32[1,32], index: 1, kind: input, shape index: {}]
  %s2 = inlined_call_operand.vmem [shape: f32[1,32], index: 2, kind: input, shape index: {}]
  %s3 = inlined_call_operand.hbm [shape: bf16[32,128], index: 3, kind: input, shape index: {}]
  %s4 = inlined_call_operand.vmem [shape: f32[1,128], index: 4, kind: input, shape index: {}]
  %s5 = inlined_call_operand.hbm [shape: f32[16,128], index: 5, kind: output, shape index: {}]
  %s6 = sld [smem:[#allocation0]]
  $region42: #{tpu_custom_call.1} parent=0
    _
  %s8 = ssub.s32 1, %s6
  %s9 = scalar_select 0, %s8, %s6
  $region1: #{tpu_custom_call.1} parent=0
    #allocation2 [shape = 'u8[8192]{0}', space=vmem, size = 0x2000, scoped, tag = 'input window, operand 0, single buffered']
    #allocation3 [shape = 's32[1]{0}', space=sflag, size = 0x4, scoped, tag = 'scoped memory for tpu_custom_call.1']
    #allocation4 [shape = 's32[1]{0}', space=sflag, size = 0x4, scoped, tag = 'scoped memory for tpu_custom_call.1']
    #allocation5 [shape = 'u8[512]{0}', space=vmem, size = 0x400, scoped, tag = 'input window, operand 1, single buffered']
    #allocation6 [shape = 's32[1]{0}', space=sflag, size = 0x4, scoped, tag = 'scoped memory for tpu_custom_call.1']
    #allocation7 [shape = 'u8[8192]{0}', space=vmem, size = 0x2000, scoped, tag = 'input window, operand 3, single buffered']
    #allocation8 [shape = 'u8[8192]{0}', space=vmem, size = 0x2000, scoped, tag = 'output window, operand 0, single buffered']
    %10 = vsyncpa [#allocation3], 0
    %11 = vsyncpa [#allocation6], 0
    %12 = vsyncpa [#allocation4], 0
    // Predicated region
    $region2: #{tpu_custom_call.1} parent=1 // pred_check
      _
    $region3: #{tpu_custom_call.1} parent=1 // pred_check_branch
      %14 = sbr.rel (0) target = $region5
    $region4: #{tpu_custom_call.1} parent=1 // pred_region
      %16 = vsyncadd [#allocation3], 0
      %s17 = sshll.u32 %s0, 4
      %s18 = int_to_ptr.hbm [resolvable:$true] %s17
      %s19 = sshll.u32 [#allocation2], 4
      %s20 = int_to_ptr.vmem [resolvable:$true] %s19
      %25 = dma.hbm_to_vmem [thread:$0]  %s18, 256, %s20, [#allocation3], 128, 128, 8
    $region5: #{tpu_custom_call.1} parent=1 // pred_fallthru
      _
    // Predicated region
    $region6: #{tpu_custom_call.1} parent=1 // pred_check
      _
    $region7: #{tpu_custom_call.1} parent=1 // pred_check_branch
      %27 = sbr.rel (0) target = $region9
    $region8: #{tpu_custom_call.1} parent=1 // pred_region
      %29 = vsyncadd [#allocation6], 0
      %s31 = sshll.u32 %s1, 4
      %s32 = int_to_ptr.hbm [resolvable:$true] %s31
      %s33 = sshll.u32 [#allocation5], 4
      %s34 = int_to_ptr.vmem [resolvable:$true] %s33
      %36 = dma.hbm_to_vmem [thread:$0]  %s32, 16, %s34, [#allocation6]
    $region9: #{tpu_custom_call.1} parent=1 // pred_fallthru
      _
    // Predicated region
    $region10: #{tpu_custom_call.1} parent=1 // pred_check
      _
    $region11: #{tpu_custom_call.1} parent=1 // pred_check_branch
      %38 = sbr.rel (0) target = $region13
    $region12: #{tpu_custom_call.1} parent=1 // pred_region
      _
    $region13: #{tpu_custom_call.1} parent=1 // pred_fallthru
      _
    // Predicated region
    $region14: #{tpu_custom_call.1} parent=1 // pred_check
      _
    $region15: #{tpu_custom_call.1} parent=1 // pred_check_branch
      %40 = sbr.rel (0) target = $region17
    $region16: #{tpu_custom_call.1} parent=1 // pred_region
      %42 = vsyncadd [#allocation6], 0
      %s43 = sshll.u32 %s3, 4
      %s44 = int_to_ptr.hbm [resolvable:$true] %s43
      %s45 = sshll.u32 [#allocation7], 4
      %s46 = int_to_ptr.vmem [resolvable:$true] %s45
      %51 = dma.hbm_to_vmem [thread:$0]  %s44, 256, %s46, [#allocation6], 64, 64, 4
    $region17: #{tpu_custom_call.1} parent=1 // pred_fallthru
      _
    // Predicated region
    $region18: #{tpu_custom_call.1} parent=1 // pred_check
      _
    $region19: #{tpu_custom_call.1} parent=1 // pred_check_branch
      %53 = sbr.rel (0) target = $region21
    $region20: #{tpu_custom_call.1} parent=1 // pred_region
      _
    $region21: #{tpu_custom_call.1} parent=1 // pred_fallthru
      _
    // Predicated region
    $region22: #{tpu_custom_call.1} parent=1 // pred_check
      _
    $region23: #{tpu_custom_call.1} parent=1 // pred_check_branch
      %55 = sbr.rel (0) target = $region25
    $region24: #{tpu_custom_call.1} parent=1 // pred_region
      %57 = dma.done [#allocation3], 256
    $region25: #{tpu_custom_call.1} parent=1 // pred_fallthru
      _
    // Predicated region
    $region26: #{tpu_custom_call.1} parent=1 // pred_check
      _
    $region27: #{tpu_custom_call.1} parent=1 // pred_check_branch
      %59 = sbr.rel (0) target = $region29
    $region28: #{tpu_custom_call.1} parent=1 // pred_region
      %61 = dma.done [#allocation6], 16
    $region29: #{tpu_custom_call.1} parent=1 // pred_fallthru
      _
    // Predicated region
    $region30: #{tpu_custom_call.1} parent=1 // pred_check
      _
    $region31: #{tpu_custom_call.1} parent=1 // pred_check_branch
      %63 = sbr.rel (0) target = $region33
    $region32: #{tpu_custom_call.1} parent=1 // pred_region
      %65 = dma.done [#allocation6], 256
    $region33: #{tpu_custom_call.1} parent=1 // pred_fallthru
      _
    %v67 = vld [vmem:[#allocation2] sm:$0xff]
    %v68 = vld [vmem:[#allocation2 + $0x8] sm:$0xff]
    %vm69 = vcmask 261120
    %v70 = vsel %vm69, %v67, 0.0
    %71 = vadd.xlane.f32.xlu0 %v70
    %v72 = vpop.xlane.xlu0 %71
    %v73 = vsel %vm69, %v68, 0.0
    %74 = vadd.xlane.f32.xlu0 %v73
    %v75 = vpop.xlane.xlu0 %74
    %v76 = vrcp.pop 32.0
    %v77 = vmul.f32 32.0, %v76
    %v78 = vsub.f32 1.0, %v77
    %v79 = vmul.f32 %v76, %v78
    %v80 = vadd.f32 %v76, %v79
    %vm81 = vweird.f32 %v76
    %v82 = vsel %vm81, %v76, %v80
    %v83 = vmul.f32 %v72, %v82
    %v84 = vmul.f32 %v75, %v82
    %v85 = vsub.f32 %v67, %v83
    %v86 = vsub.f32 %v68, %v84
    %v87 = vmul.f32 %v85, %v85
    %v88 = vmul.f32 %v86, %v86
    %v89 = vsel %vm69, %v87, 0.0
    %90 = vadd.xlane.f32.xlu0 %v89
    %v91 = vpop.xlane.xlu0 %90
    %v92 = vsel %vm69, %v88, 0.0
    %93 = vadd.xlane.f32.xlu0 %v92
    %v94 = vpop.xlane.xlu0 %93
    %v95 = vmul.f32 %v91, %v82
    %v96 = vmul.f32 %v94, %v82
    %v97 = vadd.f32 %v95, 1e-05
    %v98 = vadd.f32 %v96, 1e-05
    %v99 = vrsqrt.pop %v97
    %v100 = vmul.f32 %v99, %v97
    %v101 = vmul.f32 %v100, %v99
    %v102 = vmul.f32 0.5, %v101
    %v103 = vsub.f32 1.5, %v102
    %v104 = vmul.f32 %v99, %v103
    %vm105 = vweird.f32 %v97
    %vm106 = vweird.f32 %v99
    %vm107 = vmor %vm105, %vm106
    %v108 = vsel %vm107, %v99, %v104
    %v109 = vrsqrt.pop %v98
    %v110 = vmul.f32 %v109, %v98
    %v111 = vmul.f32 %v110, %v109
    %v112 = vmul.f32 0.5, %v111
    %v113 = vsub.f32 1.5, %v112
    %v114 = vmul.f32 %v109, %v113
    %vm115 = vweird.f32 %v98
    %vm116 = vweird.f32 %v109
    %vm117 = vmor %vm115, %vm116
    %v118 = vsel %vm117, %v109, %v114
    %v119 = vmul.f32 %v85, %v108
    %v120 = vmul.f32 %v86, %v118
    %v121 = vld [vmem:[#allocation5] sm:$0x1]
    %v123 = vperm.slane %v121, 0
    %v125 = vmul.f32 %v119, %v123
    %v126 = vmul.f32 %v120, %v123
    %v127 = vld [vmem:[%s2] sm:$0x1]
    %v129 = vperm.slane %v127, 0
    %v131 = vadd.f32 %v125, %v129
    %v132 = vadd.f32 %v126, %v129
    %v133 = vpack.c.bf16 %v132, %v131
    %v134 = vld [vmem:[#allocation7] sm:$0xf]
    %v135 = vld [vmem:[#allocation7 + $0x4] sm:$0xf]
    %v136 = vld [vmem:[#allocation7 + $0x8] sm:$0xf]
    %v137 = vld [vmem:[#allocation7 + $0xc] sm:$0xf]
    %v138 = vld [vmem:[%s4] sm:$0x1]
    %v140 = vperm.slane %v138, 0
    %v146 = vunpack.c.l.b16 %v134
    %v147 = vunpack.c.l.b16 %v135
    %v148 = vunpack.c.l.b16 %v136
    %v149 = vunpack.c.l.b16 %v137
    %v150 = vpack.c.b16 %v147, %v146
    %v151 = vpack.c.b16 %v149, %v148
    %v155 = vsel %vm69, %v133, 0
    %157 = vmatpush.bf16.msra.mxu0 0
    %158 = vmatpush.bf16.msra.mxu0 0
    %159 = vmatpush.bf16.msra.mxu0 0
    %160 = vmatpush.bf16.msra.mxu0 0
    %161 = vmatpush.bf16.msra.mxu0 0
    %162 = vmatpush.bf16.msra.mxu0 0
    %163 = vmatpush.bf16.msra.mxu0 %v151
    %164 = vmatpush.bf16.msra.mxu0 %v150
    %165 = vmatmul.bf16.gmra.mxu0 %v155
    %v166 = vpop.f32.mrf.mxu0
    %v167 = vadd.f32 %v140, %v166
    %v168 = vpop.f32.mrf.mxu0
    %v169 = vadd.f32 %v140, %v168
    %170 = vdwg.mxu0
    %v171 = vmul.f32 %v167, 0.5
    %v172 = vmul.f32 %v169, 0.5
    %v173 = vmul.f32 %v167, 0.70710677
    %v174 = vmul.f32 %v169, 0.70710677
    %v175 = vmul.f32 %v173, %v173
    %v176 = vmin.f32 16.0, %v175
    %v177 = vmul.f32 %v176, 2.1237322e-06
    %v178 = vadd.f32 %v177, 0.00028619796
    %v179 = vmul.f32 %v176, %v178
    %v180 = vadd.f32 %v179, 0.0036580483
    %v181 = vmul.f32 %v176, %v180
    %v182 = vadd.f32 %v181, 0.05243302
    %v183 = vmul.f32 %v176, %v182
    %v184 = vadd.f32 %v183, 0.18741608
    %v185 = vmul.f32 %v176, %v184
    %v186 = vadd.f32 %v185, 1.1283791
    %v187 = vmul.f32 %v173, %v186
    %v188 = vmul.f32 %v176, 3.8918573e-05
    %v189 = vadd.f32 %v188, 0.001143296
    %v190 = vmul.f32 %v176, %v189
    %v191 = vadd.f32 %v190, 0.014752088
    %v192 = vmul.f32 %v176, %v191
    %v193 = vadd.f32 %v192, 0.112945676
    %v194 = vmul.f32 %v176, %v193
    %v195 = vadd.f32 %v194, 0.4994258
    %v196 = vmul.f32 %v176, %v195
    %v197 = vadd.f32 %v196, 1.0
    %v198 = vrcp.pop %v197
    %v199 = vmul.f32 %v197, %v198
    %v200 = vsub.f32 1.0, %v199
    %v201 = vmul.f32 %v198, %v200
    %v202 = vadd.f32 %v198, %v201
    %vm203 = vweird.f32 %v197
    %vm204 = vweird.f32 %v198
    %vm205 = vmor %vm203, %vm204
    %v206 = vsel %vm205, %v198, %v202
    %v207 = vand.u32 2147483647, %v197
    %vm208 = vcmp.eq.f32.partialorder %v207, 8.507059e+37
    %v209 = vand.u32 %v197, 2147483648
    %v210 = vor.u32 1.1754944e-38, %v209
    %v211 = vsel %vm208, %v210, %v206
    %v212 = vmul.f32 %v187, %v211
    %v213 = vmin.f32 %v212, 1.0
    %v214 = vmax.f32 %v213, -1.0
    %v215 = vmul.f32 %v174, %v174
    %v216 = vmin.f32 16.0, %v215
    %v217 = vmul.f32 %v216, 2.1237322e-06
    %v218 = vadd.f32 %v217, 0.00028619796
    %v219 = vmul.f32 %v216, %v218
    %v220 = vadd.f32 %v219, 0.0036580483
    %v221 = vmul.f32 %v216, %v220
    %v222 = vadd.f32 %v221, 0.05243302
    %v223 = vmul.f32 %v216, %v222
    %v224 = vadd.f32 %v223, 0.18741608
    %v225 = vmul.f32 %v216, %v224
    %v226 = vadd.f32 %v225, 1.1283791
    %v227 = vmul.f32 %v174, %v226
    %v228 = vmul.f32 %v216, 3.8918573e-05
    %v229 = vadd.f32 %v228, 0.001143296
    %v230 = vmul.f32 %v216, %v229
    %v231 = vadd.f32 %v230, 0.014752088
    %v232 = vmul.f32 %v216, %v231
    %v233 = vadd.f32 %v232, 0.112945676
    %v234 = vmul.f32 %v216, %v233
    %v235 = vadd.f32 %v234, 0.4994258
    %v236 = vmul.f32 %v216, %v235
    %v237 = vadd.f32 %v236, 1.0
    %v238 = vrcp.pop %v237
    %v239 = vmul.f32 %v237, %v238
    %v240 = vsub.f32 1.0, %v239
    %v241 = vmul.f32 %v238, %v240
    %v242 = vadd.f32 %v238, %v241
    %vm243 = vweird.f32 %v237
    %vm244 = vweird.f32 %v238
    %vm245 = vmor %vm243, %vm244
    %v246 = vsel %vm245, %v238, %v242
    %v247 = vand.u32 2147483647, %v237
    %vm248 = vcmp.eq.f32.partialorder %v247, 8.507059e+37
    %v249 = vand.u32 %v237, 2147483648
    %v250 = vor.u32 1.1754944e-38, %v249
    %v251 = vsel %vm248, %v250, %v246
    %v252 = vmul.f32 %v227, %v251
    %v253 = vmin.f32 %v252, 1.0
    %v254 = vmax.f32 %v253, -1.0
    %v255 = vadd.f32 %v214, 1.0
    %v256 = vadd.f32 %v254, 1.0
    %v257 = vmul.f32 %v171, %v255
    %v258 = vmul.f32 %v172, %v256
    %259 = vst [vmem:[#allocation8] sm:$0xff] %v257
    %260 = vst [vmem:[#allocation8 + $0x8] sm:$0xff] %v258
    // Predicated region
    $region34: #{tpu_custom_call.1} parent=1 // pred_check
      _
    $region35: #{tpu_custom_call.1} parent=1 // pred_check_branch
      %262 = sbr.rel (0) target = $region37
    $region36: #{tpu_custom_call.1} parent=1 // pred_region
      %264 = vsyncadd [#allocation4], 0
      %s265 = sshll.u32 [#allocation8], 4
      %s266 = int_to_ptr.vmem [resolvable:$true] %s265
      %s267 = sshll.u32 %s5, 4
      %s268 = int_to_ptr.hbm [resolvable:$true] %s267
      %273 = dma.vmem_to_hbm [thread:$0]  %s266, 256, %s268, [#allocation4], 128, 128, 8
    $region37: #{tpu_custom_call.1} parent=1 // pred_fallthru
      _
    // Predicated region
    $region38: #{tpu_custom_call.1} parent=1 // pred_check
      _
    $region39: #{tpu_custom_call.1} parent=1 // pred_check_branch
      %275 = sbr.rel (0) target = $region41
    $region40: #{tpu_custom_call.1} parent=1 // pred_region
      %277 = dma.done [#allocation4], 256
    $region41: #{tpu_custom_call.1} parent=1 // pred_fallthru
      _
    %278 = vsyncpa [#allocation3], 1
    %279 = vsyncpa [#allocation6], 1
    %280 = vsyncpa [#allocation4], 1

// kernel: tpu_custom_call.1
$region0: #{tpu_custom_call.1}
  #allocation0 [shape = 'u32[]', space=smem, size = 0x4, offset = 0x4, fixed_abs, tag = 'smem constant byte address 0x4 - core index']
  #allocation1 [shape = 'u32[72,128]{1,0:T(1,128)}', space=vmem, size = 0x9000, scoped, tag = 'internal scratch']
  %s0 = inlined_call_operand.hbm [shape: f32[16,32], index: 0, kind: input, shape index: {}]
  %s1 = inlined_call_operand.hbm [shape: f32[1,32], index: 1, kind: input, shape index: {}]
  %s2 = inlined_call_operand.vmem [shape: f32[1,32], index: 2, kind: input, shape index: {}]
  %s3 = inlined_call_operand.hbm [shape: bf16[32,128], index: 3, kind: input, shape index: {}]
  %s4 = inlined_call_operand.vmem [shape: f32[1,128], index: 4, kind: input, shape index: {}]
  %s5 = inlined_call_operand.hbm [shape: f32[16,128], index: 5, kind: output, shape index: {}]
  %s6 = sld [smem:[#allocation0]]
  $region42: #{tpu_custom_call.1} parent=0
    _
  %s8 = ssub.s32 1, %s6
  %s9 = scalar_select 0, %s8, %s6
  $region1: #{tpu_custom_call.1} parent=0
    #allocation2 [shape = 'u8[8192]{0}', space=vmem, size = 0x2000, scoped, tag = 'input window, operand 0, single buffered']
    #allocation3 [shape = 's32[1]{0}', space=sflag, size = 0x4, scoped, tag = 'scoped memory for tpu_custom_call.1']
    #allocation4 [shape = 's32[1]{0}', space=sflag, size = 0x4, scoped, tag = 'scoped memory for tpu_custom_call.1']
    #allocation5 [shape = 'u8[512]{0}', space=vmem, size = 0x400, scoped, tag = 'input window, operand 1, single buffered']
    #allocation6 [shape = 's32[1]{0}', space=sflag, size = 0x4, scoped, tag = 'scoped memory for tpu_custom_call.1']
    #allocation7 [shape = 'u8[8192]{0}', space=vmem, size = 0x2000, scoped, tag = 'input window, operand 3, single buffered']
    #allocation8 [shape = 'u8[8192]{0}', space=vmem, size = 0x2000, scoped, tag = 'output window, operand 0, single buffered']
    %10 = vsyncpa [#allocation3], 0
    %11 = vsyncpa [#allocation6], 0
    %12 = vsyncpa [#allocation4], 0
    // Predicated region
    $region2: #{tpu_custom_call.1} parent=1 // pred_check
      _
    $region3: #{tpu_custom_call.1} parent=1 // pred_check_branch
      %14 = sbr.rel (0) target = $region5
    $region4: #{tpu_custom_call.1} parent=1 // pred_region
      %16 = vsyncadd [#allocation3], 0
      %s17 = sshll.u32 %s0, 4
      %s18 = int_to_ptr.hbm [resolvable:$true] %s17
      %s19 = sshll.u32 [#allocation2], 4
      %s20 = int_to_ptr.vmem [resolvable:$true] %s19
      %25 = dma.hbm_to_vmem [thread:$0]  %s18, 256, %s20, [#allocation3], 128, 128, 8
    $region5: #{tpu_custom_call.1} parent=1 // pred_fallthru
      _
    // Predicated region
    $region6: #{tpu_custom_call.1} parent=1 // pred_check
      _
    $region7: #{tpu_custom_call.1} parent=1 // pred_check_branch
      %27 = sbr.rel (0) target = $region9
    $region8: #{tpu_custom_call.1} parent=1 // pred_region
      %29 = vsyncadd [#allocation6], 0
      %s31 = sshll.u32 %s1, 4
      %s32 = int_to_ptr.hbm [resolvable:$true] %s31
      %s33 = sshll.u32 [#allocation5], 4
      %s34 = int_to_ptr.vmem [resolvable:$true] %s33
      %36 = dma.hbm_to_vmem [thread:$0]  %s32, 16, %s34, [#allocation6]
    $region9: #{tpu_custom_call.1} parent=1 // pred_fallthru
      _
    // Predicated region
    $region10: #{tpu_custom_call.1} parent=1 // pred_check
      _
    $region11: #{tpu_custom_call.1} parent=1 // pred_check_branch
      %38 = sbr.rel (0) target = $region13
    $region12: #{tpu_custom_call.1} parent=1 // pred_region
      _
    $region13: #{tpu_custom_call.1} parent=1 // pred_fallthru
      _
    // Predicated region
    $region14: #{tpu_custom_call.1} parent=1 // pred_check
      _
    $region15: #{tpu_custom_call.1} parent=1 // pred_check_branch
      %40 = sbr.rel (0) target = $region17
    $region16: #{tpu_custom_call.1} parent=1 // pred_region
      %42 = vsyncadd [#allocation6], 0
      %s43 = sshll.u32 %s3, 4
      %s44 = int_to_ptr.hbm [resolvable:$true] %s43
      %s45 = sshll.u32 [#allocation7], 4
      %s46 = int_to_ptr.vmem [resolvable:$true] %s45
      %51 = dma.hbm_to_vmem [thread:$0]  %s44, 256, %s46, [#allocation6], 64, 64, 4
    $region17: #{tpu_custom_call.1} parent=1 // pred_fallthru
      _
    // Predicated region
    $region18: #{tpu_custom_call.1} parent=1 // pred_check
      _
    $region19: #{tpu_custom_call.1} parent=1 // pred_check_branch
      %53 = sbr.rel (0) target = $region21
    $region20: #{tpu_custom_call.1} parent=1 // pred_region
      _
    $region21: #{tpu_custom_call.1} parent=1 // pred_fallthru
      _
    // Predicated region
    $region22: #{tpu_custom_call.1} parent=1 // pred_check
      _
    $region23: #{tpu_custom_call.1} parent=1 // pred_check_branch
      %55 = sbr.rel (0) target = $region25
    $region24: #{tpu_custom_call.1} parent=1 // pred_region
      %57 = dma.done [#allocation3], 256
    $region25: #{tpu_custom_call.1} parent=1 // pred_fallthru
      _
    // Predicated region
    $region26: #{tpu_custom_call.1} parent=1 // pred_check
      _
    $region27: #{tpu_custom_call.1} parent=1 // pred_check_branch
      %59 = sbr.rel (0) target = $region29
    $region28: #{tpu_custom_call.1} parent=1 // pred_region
      %61 = dma.done [#allocation6], 16
    $region29: #{tpu_custom_call.1} parent=1 // pred_fallthru
      _
    // Predicated region
    $region30: #{tpu_custom_call.1} parent=1 // pred_check
      _
    $region31: #{tpu_custom_call.1} parent=1 // pred_check_branch
      %63 = sbr.rel (0) target = $region33
    $region32: #{tpu_custom_call.1} parent=1 // pred_region
      %65 = dma.done [#allocation6], 256
    $region33: #{tpu_custom_call.1} parent=1 // pred_fallthru
      _
    %v67 = vld [vmem:[#allocation2] sm:$0xff]
    %v68 = vld [vmem:[#allocation2 + $0x8] sm:$0xff]
    %vm69 = vcmask 261120
    %v70 = vsel %vm69, %v67, 0.0
    %71 = vadd.xlane.f32.xlu0 %v70
    %v72 = vpop.xlane.xlu0 %71
    %v73 = vsel %vm69, %v68, 0.0
    %74 = vadd.xlane.f32.xlu0 %v73
    %v75 = vpop.xlane.xlu0 %74
    %v76 = vrcp.pop 32.0
    %v77 = vmul.f32 32.0, %v76
    %v78 = vsub.f32 1.0, %v77
    %v79 = vmul.f32 %v76, %v78
    %v80 = vadd.f32 %v76, %v79
    %vm81 = vweird.f32 %v76
    %v82 = vsel %vm81, %v76, %v80
    %v83 = vmul.f32 %v72, %v82
    %v84 = vmul.f32 %v75, %v82
    %v85 = vsub.f32 %v67, %v83
    %v86 = vsub.f32 %v68, %v84
    %v87 = vmul.f32 %v85, %v85
    %v88 = vmul.f32 %v86, %v86
    %v89 = vsel %vm69, %v87, 0.0
    %90 = vadd.xlane.f32.xlu0 %v89
    %v91 = vpop.xlane.xlu0 %90
    %v92 = vsel %vm69, %v88, 0.0
    %93 = vadd.xlane.f32.xlu0 %v92
    %v94 = vpop.xlane.xlu0 %93
    %v95 = vmul.f32 %v91, %v82
    %v96 = vmul.f32 %v94, %v82
    %v97 = vadd.f32 %v95, 1e-05
    %v98 = vadd.f32 %v96, 1e-05
    %v99 = vrsqrt.pop %v97
    %v100 = vmul.f32 %v99, %v97
    %v101 = vmul.f32 %v100, %v99
    %v102 = vmul.f32 0.5, %v101
    %v103 = vsub.f32 1.5, %v102
    %v104 = vmul.f32 %v99, %v103
    %vm105 = vweird.f32 %v97
    %vm106 = vweird.f32 %v99
    %vm107 = vmor %vm105, %vm106
    %v108 = vsel %vm107, %v99, %v104
    %v109 = vrsqrt.pop %v98
    %v110 = vmul.f32 %v109, %v98
    %v111 = vmul.f32 %v110, %v109
    %v112 = vmul.f32 0.5, %v111
    %v113 = vsub.f32 1.5, %v112
    %v114 = vmul.f32 %v109, %v113
    %vm115 = vweird.f32 %v98
    %vm116 = vweird.f32 %v109
    %vm117 = vmor %vm115, %vm116
    %v118 = vsel %vm117, %v109, %v114
    %v119 = vmul.f32 %v85, %v108
    %v120 = vmul.f32 %v86, %v118
    %v121 = vld [vmem:[#allocation5] sm:$0x1]
    %v123 = vperm.slane %v121, 0
    %v125 = vmul.f32 %v119, %v123
    %v126 = vmul.f32 %v120, %v123
    %v127 = vld [vmem:[%s2] sm:$0x1]
    %v129 = vperm.slane %v127, 0
    %v131 = vadd.f32 %v125, %v129
    %v132 = vadd.f32 %v126, %v129
    %v133 = vpack.c.bf16 %v132, %v131
    %v134 = vld [vmem:[#allocation7] sm:$0xf]
    %v135 = vld [vmem:[#allocation7 + $0x4] sm:$0xf]
    %v136 = vld [vmem:[#allocation7 + $0x8] sm:$0xf]
    %v137 = vld [vmem:[#allocation7 + $0xc] sm:$0xf]
    %v138 = vld [vmem:[%s4] sm:$0x1]
    %v140 = vperm.slane %v138, 0
    %v146 = vunpack.c.l.b16 %v134
    %v147 = vunpack.c.l.b16 %v135
    %v148 = vunpack.c.l.b16 %v136
    %v149 = vunpack.c.l.b16 %v137
    %v150 = vpack.c.b16 %v147, %v146
    %v151 = vpack.c.b16 %v149, %v148
    %v155 = vsel %vm69, %v133, 0
    %157 = vmatpush.bf16.msra.mxu0 0
    %158 = vmatpush.bf16.msra.mxu0 0
    %159 = vmatpush.bf16.msra.mxu0 0
    %160 = vmatpush.bf16.msra.mxu0 0
    %161 = vmatpush.bf16.msra.mxu0 0
    %162 = vmatpush.bf16.msra.mxu0 0
    %163 = vmatpush.bf16.msra.mxu0 %v151
    %164 = vmatpush.bf16.msra.mxu0 %v150
    %165 = vmatmul.bf16.gmra.mxu0 %v155
    %v166 = vpop.f32.mrf.mxu0
    %v167 = vadd.f32 %v140, %v166
    %v168 = vpop.f32.mrf.mxu0
    %v169 = vadd.f32 %v140, %v168
    %170 = vdwg.mxu0
    %v171 = vmul.f32 %v167, 0.5
    %v172 = vmul.f32 %v169, 0.5
    %v173 = vmul.f32 %v167, 0.70710677
    %v174 = vmul.f32 %v169, 0.70710677
    %v175 = vmul.f32 %v173, %v173
    %v176 = vmin.f32 16.0, %v175
    %v177 = vmul.f32 %v176, 2.1237322e-06
    %v178 = vadd.f32 %v177, 0.00028619796
    %v179 = vmul.f32 %v176, %v178
    %v180 = vadd.f32 %v179, 0.0036580483
    %v181 = vmul.f32 %v176, %v180
    %v182 = vadd.f32 %v181, 0.05243302
    %v183 = vmul.f32 %v176, %v182
    %v184 = vadd.f32 %v183, 0.18741608
    %v185 = vmul.f32 %v176, %v184
    %v186 = vadd.f32 %v185, 1.1283791
    %v187 = vmul.f32 %v173, %v186
    %v188 = vmul.f32 %v176, 3.8918573e-05
    %v189 = vadd.f32 %v188, 0.001143296
    %v190 = vmul.f32 %v176, %v189
    %v191 = vadd.f32 %v190, 0.014752088
    %v192 = vmul.f32 %v176, %v191
    %v193 = vadd.f32 %v192, 0.112945676
    %v194 = vmul.f32 %v176, %v193
    %v195 = vadd.f32 %v194, 0.4994258
    %v196 = vmul.f32 %v176, %v195
    %v197 = vadd.f32 %v196, 1.0
    %v198 = vrcp.pop %v197
    %v199 = vmul.f32 %v197, %v198
    %v200 = vsub.f32 1.0, %v199
    %v201 = vmul.f32 %v198, %v200
    %v202 = vadd.f32 %v198, %v201
    %vm203 = vweird.f32 %v197
    %vm204 = vweird.f32 %v198
    %vm205 = vmor %vm203, %vm204
    %v206 = vsel %vm205, %v198, %v202
    %v207 = vand.u32 2147483647, %v197
    %vm208 = vcmp.eq.f32.partialorder %v207, 8.507059e+37
    %v209 = vand.u32 %v197, 2147483648
    %v210 = vor.u32 1.1754944e-38, %v209
    %v211 = vsel %vm208, %v210, %v206
    %v212 = vmul.f32 %v187, %v211
    %v213 = vmin.f32 %v212, 1.0
    %v214 = vmax.f32 %v213, -1.0
    %v215 = vmul.f32 %v174, %v174
    %v216 = vmin.f32 16.0, %v215
    %v217 = vmul.f32 %v216, 2.1237322e-06
    %v218 = vadd.f32 %v217, 0.00028619796
    %v219 = vmul.f32 %v216, %v218
    %v220 = vadd.f32 %v219, 0.0036580483
    %v221 = vmul.f32 %v216, %v220
    %v222 = vadd.f32 %v221, 0.05243302
    %v223 = vmul.f32 %v216, %v222
    %v224 = vadd.f32 %v223, 0.18741608
    %v225 = vmul.f32 %v216, %v224
    %v226 = vadd.f32 %v225, 1.1283791
    %v227 = vmul.f32 %v174, %v226
    %v228 = vmul.f32 %v216, 3.8918573e-05
    %v229 = vadd.f32 %v228, 0.001143296
    %v230 = vmul.f32 %v216, %v229
    %v231 = vadd.f32 %v230, 0.014752088
    %v232 = vmul.f32 %v216, %v231
    %v233 = vadd.f32 %v232, 0.112945676
    %v234 = vmul.f32 %v216, %v233
    %v235 = vadd.f32 %v234, 0.4994258
    %v236 = vmul.f32 %v216, %v235
    %v237 = vadd.f32 %v236, 1.0
    %v238 = vrcp.pop %v237
    %v239 = vmul.f32 %v237, %v238
    %v240 = vsub.f32 1.0, %v239
    %v241 = vmul.f32 %v238, %v240
    %v242 = vadd.f32 %v238, %v241
    %vm243 = vweird.f32 %v237
    %vm244 = vweird.f32 %v238
    %vm245 = vmor %vm243, %vm244
    %v246 = vsel %vm245, %v238, %v242
    %v247 = vand.u32 2147483647, %v237
    %vm248 = vcmp.eq.f32.partialorder %v247, 8.507059e+37
    %v249 = vand.u32 %v237, 2147483648
    %v250 = vor.u32 1.1754944e-38, %v249
    %v251 = vsel %vm248, %v250, %v246
    %v252 = vmul.f32 %v227, %v251
    %v253 = vmin.f32 %v252, 1.0
    %v254 = vmax.f32 %v253, -1.0
    %v255 = vadd.f32 %v214, 1.0
    %v256 = vadd.f32 %v254, 1.0
    %v257 = vmul.f32 %v171, %v255
    %v258 = vmul.f32 %v172, %v256
    %259 = vst [vmem:[#allocation8] sm:$0xff] %v257
    %260 = vst [vmem:[#allocation8 + $0x8] sm:$0xff] %v258
    // Predicated region
    $region34: #{tpu_custom_call.1} parent=1 // pred_check
      _
    $region35: #{tpu_custom_call.1} parent=1 // pred_check_branch
      %262 = sbr.rel (0) target = $region37
    $region36: #{tpu_custom_call.1} parent=1 // pred_region
      %264 = vsyncadd [#allocation4], 0
      %s265 = sshll.u32 [#allocation8], 4
      %s266 = int_to_ptr.vmem [resolvable:$true] %s265
      %s267 = sshll.u32 %s5, 4
      %s268 = int_to_ptr.hbm [resolvable:$true] %s267
      %273 = dma.vmem_to_hbm [thread:$0]  %s266, 256, %s268, [#allocation4], 128, 128, 8
    $region37: #{tpu_custom_call.1} parent=1 // pred_fallthru
      _
    // Predicated region
    $region38: #{tpu_custom_call.1} parent=1 // pred_check
      _
    $region39: #{tpu_custom_call.1} parent=1 // pred_check_branch
      %275 = sbr.rel (0) target = $region41
    $region40: #{tpu_custom_call.1} parent=1 // pred_region
      %277 = dma.done [#allocation4], 256
    $region41: #{tpu_custom_call.1} parent=1 // pred_fallthru
      _
    %278 = vsyncpa [#allocation3], 1
    %279 = vsyncpa [#allocation6], 1
    %280 = vsyncpa [#allocation4], 1

</llo_original>
